<compile_context>
chip_gen: v7x
topology: tpu7x:2x2x1
jax: 0.10.0
libtpu: 0.0.40
codegen_flags: <defaults>
</compile_context>

<pallas_src>
import jax
import jax.numpy as jnp
from jax.experimental import pallas as pl
from jax.experimental.pallas import tpu as pltpu

MIX_NUM = 5  # mix_num in the PyTorch module


def softmax_mixture_kernel(x_ref, w_ref, b_ref, o_ref):
    # x_ref: (TN, L) input dtype; w_ref: (L, TV); b_ref: (1, TV) f32; o_ref: (TN, TV)
    x = x_ref[...].astype(w_ref.dtype)        # in-kernel cast: hidden under the MXU
    acc = jnp.dot(x, w_ref[...], preferred_element_type=jnp.float32)
    o_ref[...] = (acc + b_ref[...]).astype(o_ref.dtype)   # (1,TV) broadcasts over rows
    # TODO(synk): a fused (log-)softmax epilogue over the vocab axis needs a
    # cross-V-tile reduction (two-pass or online); left to the consumer for now.


def _pick_tile_v(V):
    # Lane-dense vocab tile; prefer >= 2 (padded) tiles so a 'parallel' grid
    # axis exists for v7x's two TensorCores (no-op on single-TC v5e/v6e).
    for tv in (512, 256, 128):
        if -(-V // tv) >= 2:
            return tv
    return 128


def prepare_params(weights, biases, compute_dtype=jnp.bfloat16, tile_v=None):
    """One-time parameter glue (hoisted out of the per-call forward).

    weights: (M, V, L) torch nn.Linear layout; biases: (M, V).
    Returns:
      w_blk: (n_vblk, L, TV) compute_dtype — contiguous per-vocab-tile slabs of
             the mixture-averaged weight matrix; vocab padded to n_vblk*TV.
      b_blk: (n_vblk, 1, TV) float32 — matching averaged bias slabs.
      V    : true (unpadded) vocab size, for post-slice.
    """
    M, V, L = weights.shape
    # Column c of torch.cat(..., dim=2) is head c // V, in-head column c % V;
    # .view(B, S, V, M) groups columns v*M + m, and mean over m is linear so it
    # folds into the parameters.  Fold is done in f32, then cast.
    w_cat = jnp.concatenate([weights[i].T for i in range(M)], axis=1)   # (L, M*V)
    b_cat = jnp.concatenate([biases[i] for i in range(M)], axis=0)      # (M*V,)
    w_avg = w_cat.reshape(L, V, M).mean(axis=2)                         # (L, V) f32
    b_avg = b_cat.reshape(V, M).mean(axis=1)                            # (V,)  f32

    TV = tile_v or _pick_tile_v(V)
    n_vblk = -(-V // TV)
    Vp = n_vblk * TV
    if Vp != V:
        w_avg = jnp.pad(w_avg, ((0, 0), (0, Vp - V)))
        b_avg = jnp.pad(b_avg, (0, Vp - V))
    # Pre-block into contiguous (L, TV) slabs: one long DMA per weight tile.
    w_blk = w_avg.reshape(L, n_vblk, TV).transpose(1, 0, 2).astype(compute_dtype)
    b_blk = b_avg.reshape(n_vblk, 1, TV).astype(jnp.float32)
    # TODO(synk): tune=True replaces the mean with a softmax(p)-weighted sum,
    # which folds identically (weighted average of the same interleaved columns).
    return w_blk, b_blk, V


def _vmem_capacity_bytes():
    try:
        info = pltpu.get_tpu_info()
        return int(getattr(info, "vmem_capacity_bytes", 64 * 1024 * 1024))
    except Exception:
        return 64 * 1024 * 1024   # conservative default (v7x per-core VMEM)


def softmax_mixture_forward(xs, w_blk, b_blk, vocab_size, out_dtype=None,
                            force_tiled_n=False):
    """xs: (B, S, L); (w_blk, b_blk, vocab_size) from prepare_params."""
    B, S, L = xs.shape
    n_vblk, Lw, TV = w_blk.shape
    assert Lw == L, (Lw, L)
    Vp = n_vblk * TV
    out_dtype = out_dtype or xs.dtype

    N = B * S
    x2 = xs.reshape(N, L)          # metadata-only reshape; NO wrapper-side cast

    x_item = jnp.dtype(x2.dtype).itemsize
    w_item = jnp.dtype(w_blk.dtype).itemsize
    o_item = jnp.dtype(out_dtype).itemsize

    vmem_cap = _vmem_capacity_bytes()
    budget = int(0.8 * vmem_cap)   # headroom for compiler-internal scratch

    def vmem_need(tn):
        # Conservative: everything double-buffered; bias sublane-pads to (8, TV) f32.
        return (2 * tn * L * x_item + 2 * L * TV * w_item
                + 2 * 8 * TV * 4 + 2 * tn * TV * o_item)

    if (not force_tiled_n) and vmem_need(N) <= budget:
        # Decode-style / moderate N: x resident, 1-D grid over V -> the LxV
        # weight matrix (dominant HBM stream) is fetched exactly once.
        grid = (n_vblk,)
        in_specs = [
            pl.BlockSpec((N, L), lambda j: (0, 0)),            # resident across j
            pl.BlockSpec((None, L, TV), lambda j: (j, 0, 0)),  # contiguous slab j
            pl.BlockSpec((None, 1, TV), lambda j: (j, 0, 0)),
        ]
        out_specs = pl.BlockSpec((N, TV), lambda j: (0, j))
        dim_sem = ("parallel",)
        Np = N
        needed = vmem_need(N)
    else:
        # Large N (prefill / training): 2-D grid; weight blocks depend only on j.
        # TN candidates reach 1024 so v6e (128 MiB VMEM) lands MXU-bound; the
        # VMEM budget automatically restrains v7x (64 MiB) to smaller tiles.
        n_cap = max(128, -(-N // 128) * 128)
        TN = 128
        for cand in (1024, 768, 512, 384, 256, 128):
            if cand <= n_cap and vmem_need(cand) <= budget:
                TN = cand
                break
        Np = -(-N // TN) * TN
        if Np != N:                 # pad rows with zeros; sliced off below
            x2 = jnp.pad(x2, ((0, Np - N), (0, 0)))
        grid = (Np // TN, n_vblk)
        in_specs = [
            pl.BlockSpec((TN, L), lambda i, j: (i, 0)),
            pl.BlockSpec((None, L, TV), lambda i, j: (j, 0, 0)),
            pl.BlockSpec((None, 1, TV), lambda i, j: (j, 0, 0)),
        ]
        out_specs = pl.BlockSpec((TN, TV), lambda i, j: (i, j))
        dim_sem = ("parallel", "parallel")
        needed = vmem_need(TN)

    vmem_limit = min(max(needed + (4 << 20), 32 * 1024 * 1024), vmem_cap)

    cost = pl.CostEstimate(
        flops=2 * Np * L * Vp,
        transcendentals=0,
        bytes_accessed=int(Np * L * x_item + n_vblk * L * TV * w_item
                           + n_vblk * TV * 4 + Np * Vp * o_item),
    )

    out = pl.pallas_call(
        softmax_mixture_kernel,
        out_shape=jax.ShapeDtypeStruct((Np, Vp), out_dtype),
        grid_spec=pltpu.PrefetchScalarGridSpec(
            num_scalar_prefetch=0,
            grid=grid,
            in_specs=in_specs,
            out_specs=out_specs,
        ),
        compiler_params=pltpu.CompilerParams(
            dimension_semantics=dim_sem,
            vmem_limit_bytes=vmem_limit,
        ),
        cost_estimate=cost,
    )(x2, w_blk, b_blk)

    return out[:N, :vocab_size].reshape(B, S, vocab_size)


def softmax_mixture_reference(xs, weights, biases):
    """Pure-JAX replica of the PyTorch forward (tune=False), f32 end-to-end."""
    B, S, L = xs.shape
    M, V, _ = weights.shape
    outs = [xs @ weights[i].T + biases[i] for i in range(M)]   # each (B, S, V)
    x_cat = jnp.concatenate(outs, axis=2)                      # (B, S, M*V)
    return jnp.mean(x_cat.reshape(B, S, V, M), axis=3)         # same as torch .view


if __name__ == "__main__":
    # Small shapes consistent with the module: xs is (batch, seq, latent_size).
    B, S = 2, 8
    latent_size = 32
    vocab_size = 256
    M = MIX_NUM

    key = jax.random.PRNGKey(0)
    kx, kw, kb = jax.random.split(key, 3)
    xs = jax.random.normal(kx, (B, S, latent_size), dtype=jnp.float32)
    # Deterministic synthetic parameters (torch Linear layout: (out, in)).
    weights = 0.05 * jax.random.normal(
        kw, (M, vocab_size, latent_size), dtype=jnp.float32)
    biases = 0.01 * jax.random.normal(kb, (M, vocab_size), dtype=jnp.float32)

    ref = softmax_mixture_reference(xs, weights, biases)

    # f32 weights: exact up to reassociation of the folded mean.
    w32, b32, V = prepare_params(weights, biases, compute_dtype=jnp.float32)
    out32 = jax.block_until_ready(softmax_mixture_forward(xs, w32, b32, V))
    assert out32.shape == (B, S, vocab_size)
    assert jnp.allclose(out32, ref, atol=1e-4, rtol=1e-4), (
        float(jnp.max(jnp.abs(out32 - ref))))

    # bf16 weights with f32 accumulation + f32 bias (recommended for v5e/v6e/v7x);
    # logits lose ~2-3 decimal digits vs f32 — fine for a softmax consumer.
    wbf, bbf, V = prepare_params(weights, biases, compute_dtype=jnp.bfloat16)
    outbf = jax.block_until_ready(softmax_mixture_forward(xs, wbf, bbf, V))
    assert jnp.allclose(outbf, ref, atol=2e-2, rtol=2e-2), (
        float(jnp.max(jnp.abs(outbf - ref))))

    # Exercise the large-N 2-D-grid (tiled-N, padded-rows) code path as well.
    out2d = jax.block_until_ready(
        softmax_mixture_forward(xs, w32, b32, V, force_tiled_n=True))
    assert out2d.shape == (B, S, vocab_size)
    assert jnp.allclose(out2d, ref, atol=1e-4, rtol=1e-4), (
        float(jnp.max(jnp.abs(out2d - ref))))

    # TODO(synk): log_forward (log-space mixture-of-softmaxes over a context
    # vector) is a separate entry point and is not implemented here.
    print("KERNEL_OK")
</pallas_src>

<mosaic_0001>
module attributes {stable_mosaic.version = 11 : i64} {
  func.func @softmax_mixture_kernel(%arg0: i32, %arg1: memref<16x32xf32, #tpu.memory_space<vmem>>, %arg2: memref<1x32x128xf32, #tpu.memory_space<vmem>>, %arg3: memref<1x1x128xf32, #tpu.memory_space<vmem>>, %arg4: memref<16x128xf32, #tpu.memory_space<vmem>>) attributes {dimension_semantics = [#tpu.dimension_semantics<parallel>], iteration_bounds = array<i64: 2>, scalar_prefetch = 0 : i64, scratch_operands = 0 : i64, tpu.core_type = #tpu.core_type<tc>, window_params = [{pipeline_mode = #tpu.pipeline_mode<synchronous>, transform_indices = @transform_0, window_bounds = array<i64: 16, 32>}, {transform_indices = @transform_1, window_bounds = array<i64: 1, 32, 128>}, {transform_indices = @transform_2, window_bounds = array<i64: 1, 1, 128>}, {transform_indices = @transform_3, window_bounds = array<i64: 16, 128>}]} {
    %c0 = arith.constant 0 : index
    %c0_0 = arith.constant 0 : index
    %0 = vector.load %arg1[%c0, %c0_0] : memref<16x32xf32, #tpu.memory_space<vmem>>, vector<16x32xf32>
    %c0_1 = arith.constant 0 : index
    %c0_2 = arith.constant 0 : index
    %c0_3 = arith.constant 0 : index
    %1 = vector.load %arg2[%c0_1, %c0_2, %c0_3] : memref<1x32x128xf32, #tpu.memory_space<vmem>>, vector<1x32x128xf32>
    %2 = vector.shape_cast %1 : vector<1x32x128xf32> to vector<32x128xf32>
    %cst = arith.constant dense<0.000000e+00> : vector<16x128xf32>
    %3 = tpu.matmul %0, %2, %cst {dimension_numbers = #tpu.dot_dimension_numbers<[1], [0], [0], [1], [0, 0, 1, 1], [], []>} : vector<16x32xf32>, vector<32x128xf32>, vector<16x128xf32> -> vector<16x128xf32>
    %c0_4 = arith.constant 0 : index
    %c0_5 = arith.constant 0 : index
    %c0_6 = arith.constant 0 : index
    %4 = vector.load %arg3[%c0_4, %c0_5, %c0_6] : memref<1x1x128xf32, #tpu.memory_space<vmem>>, vector<1x1x128xf32>
    %5 = vector.shape_cast %4 : vector<1x1x128xf32> to vector<1x128xf32>
    %6 = vector.broadcast %5 : vector<1x128xf32> to vector<16x128xf32>
    %7 = arith.addf %3, %6 : vector<16x128xf32>
    %c0_7 = arith.constant 0 : index
    %c0_8 = arith.constant 0 : index
    %8 = vector.load %arg4[%c0_7, %c0_8] : memref<16x128xf32, #tpu.memory_space<vmem>>, vector<16x128xf32>
    tpu.vector_store %arg4[%c0_7, %c0_8], %7 {strides = array<i32>} : memref<16x128xf32, #tpu.memory_space<vmem>>, vector<16x128xf32>,
    return
  }
  func.func @transform_0(%arg0: i32) -> (i32, i32) {
    %c0_i32 = arith.constant 0 : i32
    %c0_i32_0 = arith.constant 0 : i32
    %c0_i32_1 = arith.constant 0 : i32
    return %c0_i32, %c0_i32_0 : i32, i32
  }
  func.func @transform_1(%arg0: i32) -> (i32, i32, i32) {
    %c0_i32 = arith.constant 0 : i32
    %c0_i32_0 = arith.constant 0 : i32
    %c0_i32_1 = arith.constant 0 : i32
    return %arg0, %c0_i32, %c0_i32_0 : i32, i32, i32
  }
  func.func @transform_2(%arg0: i32) -> (i32, i32, i32) {
    %c0_i32 = arith.constant 0 : i32
    %c0_i32_0 = arith.constant 0 : i32
    %c0_i32_1 = arith.constant 0 : i32
    return %arg0, %c0_i32, %c0_i32_0 : i32, i32, i32
  }
  func.func @transform_3(%arg0: i32) -> (i32, i32) {
    %c0_i32 = arith.constant 0 : i32
    %c0_i32_0 = arith.constant 0 : i32
    return %c0_i32, %arg0 : i32, i32
  }
}

</mosaic_0001>

<llo_original>
// kernel: tpu_custom_call.1
$region0: #{tpu_custom_call.1}
  #allocation0 [shape = 'u32[]', space=smem, size = 0x4, offset = 0x4, fixed_abs, tag = 'smem constant byte address 0x4 - core index']
  #allocation1 [shape = 'u32[144,128]{1,0:T(1,128)}', space=vmem, size = 0x12000, scoped, tag = 'internal scratch']
  %s0 = inlined_call_operand.hbm [shape: f32[16,32], index: 0, kind: input, shape index: {}]
  %s1 = inlined_call_operand.hbm [shape: f32[2,32,128], index: 1, kind: input, shape index: {}]
  %s2 = inlined_call_operand.vmem [shape: f32[2,1,128], index: 2, kind: input, shape index: {}]
  %s3 = inlined_call_operand.hbm [shape: f32[16,256], index: 3, kind: output, shape index: {}]
  %s4 = sld [smem:[#allocation0]]
  $region53: #{tpu_custom_call.1} parent=0
    _
  %s6 = ssub.s32 1, %s4
  %s7 = scalar_select 0, %s6, %s4
  $region1: #{tpu_custom_call.1} parent=0
    #allocation2 [shape = 'u8[8192]{0}', space=vmem, size = 0x2000, scoped, tag = 'input window, operand 0, single buffered']
    #allocation3 [shape = 's32[2]{0}', space=sflag, size = 0x8, scoped, tag = 'scoped memory for tpu_custom_call.1']
    #allocation4 [shape = 's32[2]{0}', space=sflag, size = 0x8, scoped, tag = 'scoped memory for tpu_custom_call.1']
    #allocation5 [shape = 'u8[32768]{0}', space=vmem, size = 0x8000, scoped, tag = 'input window, operand 1']
    #allocation6 [shape = 's32[2]{0}', space=sflag, size = 0x8, scoped, tag = 'scoped memory for tpu_custom_call.1']
    #allocation7 [shape = 'u8[16384]{0}', space=vmem, size = 0x4000, scoped, tag = 'output window, operand 0']
    %8 = vsyncpa [#allocation3], 0
    %9 = vsyncpa [#allocation6], 0
    %s10 = scalar_lea.sflag [#allocation6], 1
    %11 = vsyncpa %s10, 0
    %12 = vsyncpa [#allocation4], 0
    %s13 = scalar_lea.sflag [#allocation4], 1
    %14 = vsyncpa %s13, 0
    loop: start=0, step=1, limit=4
    $region2: #{tpu_custom_call.1} parent=1 // loop_pre_header
      _
    $region3: #{tpu_custom_call.1} parent=1 // loop_header
      %s16 = sphi 0, %s20
      %p17 = scmp.ge.s32.totalorder %s16, 4
      %s24 = sphi 0, %s24
      %s26 = sphi 0, %s24
      %s27 = sphi 0, %s26
      %s41 = sphi 0, %s27
      %s47 = sphi 0, %s49
      %s50 = sphi 0, %s47
      %s51 = sphi 0, %s50
      %s67 = sphi 0, %s51
      %s73 = sphi 0, %s75
      %s76 = sphi 0, %s73
      %s77 = sphi 0, %s76
      %s93 = sphi 0, %s77
      %s99 = sphi 0, %s101
      %s102 = sphi 0, %s99
      %s103 = sphi 0, %s102
      %s119 = sphi 0, %s103
    $region4: #{tpu_custom_call.1} parent=1 // loop_header_branch
      %19 = sbr.rel (%p17) target = $region8
    $region5: #{tpu_custom_call.1} parent=1 // loop_body
      %s21 = ssub.s32 %s16, 1
      %s22 = ssub.s32 %s16, 2
      %s23 = sadd.s32 %s16, 1
      %s25 = sadd.s32 %s24, 1
      %p28 = scmp.eq.s32.totalorder %s16, 1
      %p29 = scmp.ne.s32.totalorder %s24, %s26
      %p30 = scmp.eq.s32.totalorder %s16, 0
      %p31 = por %p29, %p30
      %p32 = scmp.ne.s32.totalorder %s24, %s26
      %p33 = scmp.eq.s32.totalorder %s21, 1
      %p34 = por %p32, %p33
      %p35 = scmp.ne.s32.totalorder %s26, %s27
      %p36 = scmp.eq.s32.totalorder %s21, 0
      %p37 = por %p35, %p36
      %p38 = scmp.ne.s32.totalorder %s26, %s27
      %p39 = scmp.eq.s32.totalorder %s22, 1
      %p40 = por %p38, %p39
      %p42 = scmp.ne.s32.totalorder %s27, %s41
      %p43 = scmp.eq.s32.totalorder %s22, 0
      %p44 = por %p42, %p43
      %s45 = ssub.s32 %s16, %s23
      %p46 = scmp.eq.s32.totalorder %s45, 0
      %s48 = sadd.s32 %s47, 1
      %s49 = scalar_select %p46, %s47, %s48
      %p52 = pneg %p46
      %p53 = scmp.eq.s32.totalorder %s16, 1
      %p54 = por %p52, %p53
      %p55 = scmp.ne.s32.totalorder %s47, %s50
      %p56 = scmp.eq.s32.totalorder %s16, 0
      %p57 = por %p55, %p56
      %p58 = scmp.ne.s32.totalorder %s47, %s50
      %p59 = scmp.eq.s32.totalorder %s21, 1
      %p60 = por %p58, %p59
      %p61 = scmp.ne.s32.totalorder %s50, %s51
      %p62 = scmp.eq.s32.totalorder %s21, 0
      %p63 = por %p61, %p62
      %p64 = scmp.ne.s32.totalorder %s50, %s51
      %p65 = scmp.eq.s32.totalorder %s22, 1
      %p66 = por %p64, %p65
      %p68 = scmp.ne.s32.totalorder %s51, %s67
      %p69 = scmp.eq.s32.totalorder %s22, 0
      %p70 = por %p68, %p69
      %s71 = ssub.s32 %s16, %s23
      %p72 = scmp.eq.s32.totalorder %s71, 0
      %s74 = sadd.s32 %s73, 1
      %s75 = scalar_select %p72, %s73, %s74
      %p78 = pneg %p72
      %p79 = scmp.eq.s32.totalorder %s16, 1
      %p80 = por %p78, %p79
      %p81 = scmp.ne.s32.totalorder %s73, %s76
      %p82 = scmp.eq.s32.totalorder %s16, 0
      %p83 = por %p81, %p82
      %p84 = scmp.ne.s32.totalorder %s73, %s76
      %p85 = scmp.eq.s32.totalorder %s21, 1
      %p86 = por %p84, %p85
      %p87 = scmp.ne.s32.totalorder %s76, %s77
      %p88 = scmp.eq.s32.totalorder %s21, 0
      %p89 = por %p87, %p88
      %p90 = scmp.ne.s32.totalorder %s76, %s77
      %p91 = scmp.eq.s32.totalorder %s22, 1
      %p92 = por %p90, %p91
      %p94 = scmp.ne.s32.totalorder %s77, %s93
      %p95 = scmp.eq.s32.totalorder %s22, 0
      %p96 = por %p94, %p95
      %s97 = ssub.s32 %s16, %s23
      %p98 = scmp.eq.s32.totalorder %s97, 0
      %s100 = sadd.s32 %s99, 1
      %s101 = scalar_select %p98, %s99, %s100
      %p104 = pneg %p98
      %p105 = scmp.eq.s32.totalorder %s16, 1
      %p106 = por %p104, %p105
      %p107 = scmp.ne.s32.totalorder %s99, %s102
      %p108 = scmp.eq.s32.totalorder %s16, 0
      %p109 = por %p107, %p108
      %p110 = scmp.ne.s32.totalorder %s99, %s102
      %p111 = scmp.eq.s32.totalorder %s21, 1
      %p112 = por %p110, %p111
      %p113 = scmp.ne.s32.totalorder %s102, %s103
      %p114 = scmp.eq.s32.totalorder %s21, 0
      %p115 = por %p113, %p114
      %p116 = scmp.ne.s32.totalorder %s102, %s103
      %p117 = scmp.eq.s32.totalorder %s22, 1
      %p118 = por %p116, %p117
      %p120 = scmp.ne.s32.totalorder %s103, %s119
      %p121 = scmp.eq.s32.totalorder %s22, 0
      %p122 = por %p120, %p121
      %p123 = scmp.le.s32.totalorder 1, %s16
      %p124 = scmp.lt.s32.totalorder %s16, 3
      %p125 = pnand %p123, %p124
      %p126 = pneg %p125
      // Predicated region
      $region9: #{tpu_custom_call.1} parent=5 // pred_check
        _
      $region10: #{tpu_custom_call.1} parent=5 // pred_check_branch
        %128 = sbr.rel (%p125) target = $region12
      $region11: #{tpu_custom_call.1} parent=5 // pred_region
        %s129 = ssub.s32 %s16, 1
        // Predicated region
        $region13: #{tpu_custom_call.1} parent=11 // pred_check
          %p130 = pneg %p37
        $region14: #{tpu_custom_call.1} parent=11 // pred_check_branch
          %132 = sbr.rel (%p130) target = $region16
        $region15: #{tpu_custom_call.1} parent=11 // pred_region
          %s134 = ssub.s32 256, 256
          %135 = vsyncadd [#allocation3], %s134
          %s136 = sshll.u32 [#allocation2], 4
          %s137 = int_to_ptr.vmem [resolvable:$true] %s136
          %142 = dma.hbm_to_vmem [thread:$0]  %s0, 256, %s137, [#allocation3], 128, 128, 8
        $region16: #{tpu_custom_call.1} parent=11 // pred_fallthru
          _
      $region12: #{tpu_custom_call.1} parent=5 // pred_fallthru
        _
      %p143 = scmp.lt.s32.totalorder %s16, 2
      // Predicated region
      $region17: #{tpu_custom_call.1} parent=5 // pred_check
        %p144 = pneg %p143
      $region18: #{tpu_custom_call.1} parent=5 // pred_check_branch
        %146 = sbr.rel (%p144) target = $region20
      $region19: #{tpu_custom_call.1} parent=5 // pred_region
        // Predicated region
        $region21: #{tpu_custom_call.1} parent=19 // pred_check
          %p147 = pneg %p57
        $region22: #{tpu_custom_call.1} parent=19 // pred_check_branch
          %149 = sbr.rel (%p147) target = $region24
        $region23: #{tpu_custom_call.1} parent=19 // pred_region
          %s150 = sand.u32 %s47, 1
          %s151 = scalar_lea.sflag [#allocation6], %s150
          %s152 = sand.u32 %s47, 1
          %s153 = smul.addr %s152, 32
          %s154 = scalar_lea.vmem [#allocation5], %s153
          %s156 = ssub.s32 512, 512
          %157 = vsyncadd %s151, %s156
          %s158 = smul.addr %s16, 4
          %s159 = smul.addr %s158, 128
          %s160 = scalar_lea.hbm %s1, %s159
          %s161 = sshll.u32 %s154, 4
          %s162 = int_to_ptr.vmem [resolvable:$true] %s161
          %167 = dma.hbm_to_vmem [thread:$0]  %s160, 512, %s162, %s151, 128, 128, 8
        $region24: #{tpu_custom_call.1} parent=19 // pred_fallthru
          _
        // Predicated region
        $region25: #{tpu_custom_call.1} parent=19 // pred_check
          %p168 = pneg %p83
        $region26: #{tpu_custom_call.1} parent=19 // pred_check_branch
          %170 = sbr.rel (%p168) target = $region28
        $region27: #{tpu_custom_call.1} parent=19 // pred_region
          %p171 = scmp.lt.s32.totalorder %s16, 1
          %s172 = scalar_select %p171, %s16, 1
          %s173 = scalar_lea.vmem %s2, %s172
        $region28: #{tpu_custom_call.1} parent=19 // pred_fallthru
          _
      $region20: #{tpu_custom_call.1} parent=5 // pred_fallthru
        _
      %p174 = scmp.le.s32.totalorder 1, %s16
      %p175 = scmp.lt.s32.totalorder %s16, 3
      %p176 = pnand %p174, %p175
      %p177 = pneg %p176
      // Predicated region
      $region29: #{tpu_custom_call.1} parent=5 // pred_check
        _
      $region30: #{tpu_custom_call.1} parent=5 // pred_check_branch
        %179 = sbr.rel (%p176) target = $region32
      $region31: #{tpu_custom_call.1} parent=5 // pred_region
        %s180 = ssub.s32 %s16, 1
        // Predicated region
        $region33: #{tpu_custom_call.1} parent=31 // pred_check
          %p181 = pneg %p37
        $region34: #{tpu_custom_call.1} parent=31 // pred_check_branch
          %183 = sbr.rel (%p181) target = $region36
        $region35: #{tpu_custom_call.1} parent=31 // pred_region
          %184 = dma.done [#allocation3], 256
        $region36: #{tpu_custom_call.1} parent=31 // pred_fallthru
          _
        %s185 = sand.u32 %s50, 1
        %s186 = scalar_lea.sflag [#allocation6], %s185
        %s187 = sand.u32 %s50, 1
        %s188 = smul.addr %s187, 32
        %s189 = scalar_lea.vmem [#allocation5], %s188
        // Predicated region
        $region37: #{tpu_custom_call.1} parent=31 // pred_check
          %p190 = pneg %p63
        $region38: #{tpu_custom_call.1} parent=31 // pred_check_branch
          %192 = sbr.rel (%p190) target = $region40
        $region39: #{tpu_custom_call.1} parent=31 // pred_region
          %193 = dma.done %s186, 512
        $region40: #{tpu_custom_call.1} parent=31 // pred_fallthru
          _
        %p194 = pneg %p37
        %p195 = pneg %p34
        %s196 = sand.u32 %s50, 1
        %s197 = scalar_lea.sflag [#allocation6], %s196
        %s198 = sand.u32 %s50, 1
        %s199 = smul.addr %s198, 32
        %s200 = scalar_lea.vmem [#allocation5], %s199
        %p201 = pneg %p63
        %p202 = pneg %p60
        %p203 = scmp.lt.s32.totalorder %s21, 1
        %s204 = scalar_select %p203, %s21, 1
        %s205 = scalar_lea.vmem %s2, %s204
        %p206 = pneg %p89
        %p207 = pneg %p86
        %p208 = pneg %p115
        %p209 = pneg %p112
        %s210 = sand.u32 %s102, 1
        %s211 = scalar_lea.sflag [#allocation4], %s210
        %s212 = sand.u32 %s102, 1
        %s213 = smul.addr %s212, 16
        %s214 = scalar_lea.vmem [#allocation7], %s213
        %p215 = scmp.lt.s32.totalorder %s21, 1
        %s216 = scalar_select %p215, %s21, 1
        %s217 = scalar_lea.vmem %s2, %s216
        %v218 = vld [vmem:[#allocation2] sm:$0xff]
        %v219 = vld [vmem:[#allocation2 + $0x8] sm:$0xff]
        %v220 = vld [vmem:[%s189] sm:$0xff]
        %v221 = vld [vmem:[%s189 + $0x8] sm:$0xff]
        %v222 = vld [vmem:[%s189 + $0x10] sm:$0xff]
        %v223 = vld [vmem:[%s189 + $0x18] sm:$0xff]
        %v224 = vld [vmem:[%s217] sm:$0x1]
        %v226 = vlaneseq
        %v227 = vshrl.u32 %v226, 7
        %v228 = vsub.s32 0, %v227
        %v229 = vrot.slane %v224, %v228
        %vm231 = vcmask 261120
        %v233 = vsel %vm231, %v218, 0
        %v236 = vsel %vm231, %v219, 0
        %238 = vmatprep.subr.mxu0 0.0
        %239 = vmatpush1.msra.mxu0 %v220
        %240 = vmatprep.subr.mxu0 0.0
        %241 = vmatpush1.msra.mxu0 %v221
        %242 = vmatprep.subr.mxu0 0.0
        %243 = vmatpush1.msra.mxu0 %v222
        %244 = vmatprep.subr.mxu0 0.0
        %245 = vmatpush1.msra.mxu0 %v223
        %246 = vmatprep.subr.mxu0 0.0
        %247 = vmatpush1.msra.mxu0 0.0
        %248 = vmatprep.subr.mxu0 0.0
        %249 = vmatpush1.msra.mxu0 0.0
        %250 = vmatprep.subr.mxu0 0.0
        %251 = vmatpush1.msra.mxu0 0.0
        %252 = vmatprep.subr.mxu0 0.0
        %253 = vmatpush1.msra.mxu0 0.0
        %254 = vmatprep.subr.mxu0 0.0
        %255 = vmatpush1.msra.mxu0 0.0
        %256 = vmatprep.subr.mxu0 0.0
        %257 = vmatpush1.msra.mxu0 0.0
        %258 = vmatprep.subr.mxu0 0.0
        %259 = vmatpush1.msra.mxu0 0.0
        %260 = vmatprep.subr.mxu0 0.0
        %261 = vmatpush1.msra.mxu0 0.0
        %262 = vmatprep.subr.mxu0 0.0
        %263 = vmatpush1.msra.mxu0 0.0
        %264 = vmatprep.subr.mxu0 0.0
        %265 = vmatpush1.msra.mxu0 0.0
        %266 = vmatprep.subr.mxu0 0.0
        %267 = vmatpush1.msra.mxu0 0.0
        %268 = vmatprep.subr.mxu0 0.0
        %269 = vmatpush1.msra.mxu0 0.0
        %270 = vmatprep.subr.mxu0 0.0
        %271 = vmatpush1.msra.mxu0 0.0
        %272 = vmatprep.subr.mxu0 0.0
        %273 = vmatpush1.msra.mxu0 0.0
        %274 = vmatprep.subr.mxu0 0.0
        %275 = vmatpush1.msra.mxu0 0.0
        %276 = vmatprep.subr.mxu0 0.0
        %277 = vmatpush1.msra.mxu0 0.0
        %278 = vmatprep.subr.mxu0 0.0
        %279 = vmatpush1.msra.mxu0 0.0
        %280 = vmatprep.subr.mxu0 0.0
        %281 = vmatpush1.msra.mxu0 0.0
        %282 = vmatprep.subr.mxu0 0.0
        %283 = vmatpush1.msra.mxu0 0.0
        %284 = vmatprep.subr.mxu0 0.0
        %285 = vmatpush1.msra.mxu0 0.0
        %286 = vmatprep.subr.mxu0 0.0
        %287 = vmatpush1.msra.mxu0 0.0
        %288 = vmatprep.subr.mxu0 0.0
        %289 = vmatpush1.msra.mxu0 0.0
        %290 = vmatprep.subr.mxu0 0.0
        %291 = vmatpush1.msra.mxu0 0.0
        %292 = vmatprep.subr.mxu0 0.0
        %293 = vmatpush1.msra.mxu0 0.0
        %294 = vmatprep.subr.mxu0 0.0
        %295 = vmatpush1.msra.mxu0 0.0
        %296 = vmatprep.subr.mxu0 0.0
        %297 = vmatpush1.msra.mxu0 0.0
        %298 = vmatprep.subr.mxu0 0.0
        %299 = vmatpush1.msra.mxu0 0.0
        %300 = vmatprep.subr.mxu0 0.0
        %301 = vmatpush1.msra.mxu0 0.0
        %302 = vmatprep.mubr.f32.mxu0 0.0
        %303 = vmatmul.mubr.f32.gmra.mrb[0].mxu0 %v233
        %v304 = vpop.f32.mrb[0].mxu0
        %v305 = vadd.f32 %v229, %v304
        %v306 = vpop.f32.mrb[0].mxu0
        %307 = vmatprep.mubr.f32.mxu0 0.0
        %308 = vmatmul.mubr.f32.gmra.mrb[0].mxu0 %v236
        %v309 = vpop.f32.mrb[0].mxu0
        %v310 = vadd.f32 %v229, %v309
        %v311 = vpop.f32.mrb[0].mxu0
        %312 = vdwg.mxu0
        %313 = vst [vmem:[%s214] sm:$0xff] %v305
        %314 = vst [vmem:[%s214 + $0x8] sm:$0xff] %v310
        %s315 = sand.u32 %s102, 1
        %s316 = scalar_lea.sflag [#allocation4], %s315
        %s317 = sand.u32 %s102, 1
        %s318 = smul.addr %s317, 16
        %s319 = scalar_lea.vmem [#allocation7], %s318
        // Predicated region
        $region41: #{tpu_custom_call.1} parent=31 // pred_check
          %p320 = pneg %p112
        $region42: #{tpu_custom_call.1} parent=31 // pred_check_branch
          %322 = sbr.rel (%p320) target = $region44
        $region43: #{tpu_custom_call.1} parent=31 // pred_region
          %s324 = ssub.s32 256, 256
          %325 = vsyncadd %s316, %s324
          %s326 = smul.addr %s21, 128
          %s327 = scalar_lea.hbm %s3, %s326
          %s328 = sshll.u32 %s319, 4
          %s329 = int_to_ptr.vmem [resolvable:$true] %s328
          %334 = dma.vmem_to_hbm [thread:$0]  %s329, 256, %s327, %s316, 128, 256, 8
        $region44: #{tpu_custom_call.1} parent=31 // pred_fallthru
          _
      $region32: #{tpu_custom_call.1} parent=5 // pred_fallthru
        _
      %p335 = scmp.le.s32.totalorder 2, %s16
      // Predicated region
      $region45: #{tpu_custom_call.1} parent=5 // pred_check
        %p336 = pneg %p335
      $region46: #{tpu_custom_call.1} parent=5 // pred_check_branch
        %338 = sbr.rel (%p336) target = $region48
      $region47: #{tpu_custom_call.1} parent=5 // pred_region
        %s339 = ssub.s32 %s16, 2
        // Predicated region
        $region49: #{tpu_custom_call.1} parent=47 // pred_check
          %p340 = pneg %p118
        $region50: #{tpu_custom_call.1} parent=47 // pred_check_branch
          %342 = sbr.rel (%p340) target = $region52
        $region51: #{tpu_custom_call.1} parent=47 // pred_region
          %s343 = sand.u32 %s103, 1
          %s344 = scalar_lea.sflag [#allocation4], %s343
          %s345 = sand.u32 %s103, 1
          %s346 = smul.addr %s345, 16
          %s347 = scalar_lea.vmem [#allocation7], %s346
          %348 = dma.done %s344, 256
        $region52: #{tpu_custom_call.1} parent=47 // pred_fallthru
          _
      $region48: #{tpu_custom_call.1} parent=5 // pred_fallthru
        _
    $region6: #{tpu_custom_call.1} parent=1 // loop_footer
      %s20 = sadd.s32 1, %s16
    $region7: #{tpu_custom_call.1} parent=1 // loop_footer_branch
      %15 = sbr.rel target = $region3
    $region8: #{tpu_custom_call.1} parent=1 // loop_exit
      _
    %349 = vsyncpa [#allocation3], 1
    %s350 = scalar_lea.sflag [#allocation3], 1
    %351 = vsyncpa %s350, 1
    %352 = vsyncpa [#allocation6], 1
    %s353 = scalar_lea.sflag [#allocation6], 1
    %354 = vsyncpa %s353, 1
    %355 = vsyncpa [#allocation4], 1
    %s356 = scalar_lea.sflag [#allocation4], 1
    %357 = vsyncpa %s356, 1

</llo_original>
